<compile_context>
chip_gen: v6e
topology: v6e:2x2x1
jax: 0.10.0
libtpu: 0.0.40
codegen_flags: <defaults>
</compile_context>

<pallas_src>
import jax
import jax.numpy as jnp
from jax.experimental import pallas as pl
from jax.experimental.pallas import tpu as pltpu


def conv_encoder_kernel(x_ref, wc_ref, bc_ref, wd_ref, bd_ref, out_ref):
    """Fused Conv1d + ReLU + max-pool + Linear + ReLU for one batch tile.

    x_ref:  (S, TB, Cin)          activations, native (seq, batch, emb) layout
    wc_ref: (K*Cin, Cout_p)       im2col'ed conv weight, rows ordered (k, cin)
    bc_ref: (1, Cout_p)           conv bias (f32, zero-padded)
    wd_ref: (Cout_p, Nout_p)      dense weight (transposed + zero-padded)
    bd_ref: (1, Nout_p)           dense bias (f32, zero-padded)
    out_ref: (TB, Nout_p)         lane-dense output slab
    """
    S, TB, Cin = x_ref.shape
    KCin, Cout_p = wc_ref.shape
    K = KCin // Cin
    L_out = S - K + 1

    # --- im2col operand ------------------------------------------------------
    # Tap k contributes input rows [k, k+L_out) (leading-axis slices are
    # layout-preserving), stacked on the feature/lane axis in (k, cin) order to
    # match wc_ref's row order.  One concat, one matmul — contraction K*Cin.
    cols = jnp.concatenate([x_ref[k:k + L_out, :, :] for k in range(K)],
                           axis=-1)                       # (L_out, TB, K*Cin)
    cols = cols.reshape(L_out * TB, KCin)

    # --- Conv1d (VALID) as one MXU matmul, f32 accumulation -------------------
    y = jnp.dot(cols, wc_ref[...], preferred_element_type=jnp.float32)

    # --- max-pool over time, then bias + ReLU (exact rewrite for max pooling) -
    # bias is constant over time and ReLU is monotone, so
    #   max_t relu(conv_t + b) == relu(max_t conv_t + b).
    pooled = jnp.max(y.reshape(L_out, TB, Cout_p), axis=0)        # (TB, Cout_p)
    pooled = jnp.maximum(pooled + bc_ref[...], 0.0)
    # TODO(synk): dropout is identity here (p=0.0 / eval mode); training-mode
    # dropout would need pltpu.prng_* masks.

    # --- batched dense + ReLU, single lane-dense store -------------------------
    dense = jnp.dot(pooled.astype(wd_ref.dtype), wd_ref[...],
                    preferred_element_type=jnp.float32)
    out_ref[...] = jnp.maximum(dense + bd_ref[...], 0.0).astype(out_ref.dtype)


def _pad_to(n, m):
    return ((n + m - 1) // m) * m


def conv_encoder_forward(token_embed, w_conv, b_conv, w_dense, b_dense, *,
                         batch_tile=None, compute_dtype=jnp.float32,
                         vmem_limit_bytes=48 * 1024 * 1024):
    """token_embed: (seq_len, batch, emb_dim)  ->  (batch, output_size).

    batch_tile:    batch rows per grid step (None -> whole batch in one step).
                   Must be a multiple of 8 (sublane) or equal to batch.  At
                   production shapes target >=512 activation rows per step;
                   on v7x pick ~half the v6e tile (64 MiB physical VMEM) and
                   keep batch // batch_tile >= 2 so the "parallel" grid axis
                   can occupy both TensorCores.
    compute_dtype: MXU operand dtype.  Use jnp.bfloat16 on v6e/v7x at real
                   shapes (f32 accumulation + f32 pool/bias/ReLU are kept
                   inside the kernel).  Demo stays f32.
    vmem_limit_bytes: explicit scoped-VMEM cap (default scoped limits are only
                   16/32 MiB); raise toward ~96-100 MiB on v5e/v6e for very
                   large batch tiles, keep <= ~48 MiB on v7x.
    """
    S, B, Cin = token_embed.shape
    Cout, _, K = w_conv.shape          # PyTorch Conv1d weight: (Cout, Cin, K)
    out_size = w_dense.shape[0]        # PyTorch Linear weight: (out_size, Cout)
    L_out = S - K + 1
    assert L_out >= 1, (S, K)

    TB = B if batch_tile is None else batch_tile
    assert B % TB == 0, (B, TB)
    assert TB == B or TB % 8 == 0, "batch_tile must be a multiple of 8 or == batch"

    # Lane-dense padding of the channel / output dims (exact: zero weights and
    # zero bias in the padded slots contribute nothing; padded outputs sliced).
    Cout_p = _pad_to(Cout, 128)
    Nout_p = _pad_to(out_size, 128)

    # Glue (plain JAX): weight layout changes + zero padding + optional cast.
    # No transpose/copy of the activations.
    x = token_embed.astype(compute_dtype)                            # (S, B, Cin)

    wc = jnp.transpose(w_conv, (2, 1, 0)).reshape(K * Cin, Cout)     # (K*Cin, Cout)
    wc = jnp.pad(wc, ((0, 0), (0, Cout_p - Cout))).astype(compute_dtype)
    bc = jnp.pad(b_conv, (0, Cout_p - Cout)).reshape(1, Cout_p).astype(jnp.float32)

    wd = jnp.pad(jnp.transpose(w_dense),                             # (Cout, out)
                 ((0, Cout_p - Cout), (0, Nout_p - out_size))).astype(compute_dtype)
    bd = jnp.pad(b_dense, (0, Nout_p - out_size)).reshape(1, Nout_p).astype(jnp.float32)

    out_padded = pl.pallas_call(
        conv_encoder_kernel,
        out_shape=jax.ShapeDtypeStruct((B, Nout_p), jnp.float32),
        grid=(B // TB,),
        in_specs=[
            pl.BlockSpec((S, TB, Cin), lambda i: (0, i, 0)),
            pl.BlockSpec((K * Cin, Cout_p), lambda i: (0, 0)),   # weights resident
            pl.BlockSpec((1, Cout_p), lambda i: (0, 0)),
            pl.BlockSpec((Cout_p, Nout_p), lambda i: (0, 0)),
            pl.BlockSpec((1, Nout_p), lambda i: (0, 0)),
        ],
        out_specs=pl.BlockSpec((TB, Nout_p), lambda i: (i, 0)),
        compiler_params=pltpu.CompilerParams(
            dimension_semantics=("parallel",),      # batch tiles independent
            vmem_limit_bytes=vmem_limit_bytes),
    )(x, wc, bc, wd, bd)

    return out_padded[:, :out_size]
    # TODO(synk): pooling='rnn' (GRU pooling path) is not implemented here.


def reference_forward(token_embed, w_conv, b_conv, w_dense, b_dense):
    """Pure-JAX reference mirroring the PyTorch module (pooling='max', eval)."""
    x = jnp.transpose(token_embed, (1, 2, 0))   # (B, Cin, S)  == NCW
    y = jax.lax.conv_general_dilated(
        x, w_conv, window_strides=(1,), padding='VALID',
        dimension_numbers=('NCH', 'OIH', 'NCH'))           # (B, Cout, L_out)
    y = y + b_conv[None, :, None]
    y = jnp.maximum(y, 0.0)
    y = jnp.max(y, axis=2)                                  # max-pool over L_out
    y = y @ w_dense.T + b_dense
    return jnp.maximum(y, 0.0)


if __name__ == "__main__":
    # Small shapes consistent with the module's forward.
    seq_len, batch = 8, 2
    in_channels, out_channels, kernel_size, output_size = 16, 32, 3, 32

    key = jax.random.PRNGKey(0)
    k_x, k_wc, k_bc, k_wd, k_bd = jax.random.split(key, 5)

    token_embed = jax.random.normal(k_x, (seq_len, batch, in_channels), jnp.float32)

    # Deterministic parameter init (PyTorch-style uniform bounds, synthetic).
    conv_bound = 1.0 / (in_channels * kernel_size) ** 0.5
    w_conv = jax.random.uniform(k_wc, (out_channels, in_channels, kernel_size),
                                jnp.float32, -conv_bound, conv_bound)
    b_conv = jax.random.uniform(k_bc, (out_channels,), jnp.float32,
                                -conv_bound, conv_bound)
    lin_bound = 1.0 / out_channels ** 0.5
    w_dense = jax.random.uniform(k_wd, (output_size, out_channels), jnp.float32,
                                 -lin_bound, lin_bound)
    b_dense = jax.random.uniform(k_bd, (output_size,), jnp.float32,
                                 -lin_bound, lin_bound)

    out = conv_encoder_forward(token_embed, w_conv, b_conv, w_dense, b_dense)
    out = jax.block_until_ready(out)

    ref = reference_forward(token_embed, w_conv, b_conv, w_dense, b_dense)
    assert out.shape == (batch, output_size), out.shape
    assert jnp.allclose(out, ref, atol=1e-5, rtol=1e-5), (
        float(jnp.max(jnp.abs(out - ref))))

    print("KERNEL_OK")
</pallas_src>

<mosaic_0001>
module attributes {stable_mosaic.version = 11 : i64} {
  func.func @conv_encoder_kernel(%arg0: i32, %arg1: memref<8x2x16xf32, #tpu.memory_space<vmem>>, %arg2: memref<48x128xf32, #tpu.memory_space<vmem>>, %arg3: memref<1x128xf32, #tpu.memory_space<vmem>>, %arg4: memref<128x128xf32, #tpu.memory_space<vmem>>, %arg5: memref<1x128xf32, #tpu.memory_space<vmem>>, %arg6: memref<2x128xf32, #tpu.memory_space<vmem>>) attributes {dimension_semantics = [#tpu.dimension_semantics<parallel>], iteration_bounds = array<i64: 1>, scalar_prefetch = 0 : i64, scratch_operands = 0 : i64, tpu.core_type = #tpu.core_type<tc>, window_params = [{transform_indices = @transform_0, window_bounds = array<i64: 8, 2, 16>}, {pipeline_mode = #tpu.pipeline_mode<synchronous>, transform_indices = @transform_1, window_bounds = array<i64: 48, 128>}, {pipeline_mode = #tpu.pipeline_mode<synchronous>, transform_indices = @transform_2, window_bounds = array<i64: 1, 128>}, {pipeline_mode = #tpu.pipeline_mode<synchronous>, transform_indices = @transform_3, window_bounds = array<i64: 128, 128>}, {pipeline_mode = #tpu.pipeline_mode<synchronous>, transform_indices = @transform_4, window_bounds = array<i64: 1, 128>}, {transform_indices = @transform_5, window_bounds = array<i64: 2, 128>}]} {
    %c0 = arith.constant 0 : index
    %c0_0 = arith.constant 0 : index
    %c0_1 = arith.constant 0 : index
    %0 = vector.load %arg1[%c0, %c0_0, %c0_1] : memref<8x2x16xf32, #tpu.memory_space<vmem>>, vector<6x2x16xf32>
    %c1 = arith.constant 1 : index
    %c0_2 = arith.constant 0 : index
    %c0_3 = arith.constant 0 : index
    %1 = vector.load %arg1[%c1, %c0_2, %c0_3] : memref<8x2x16xf32, #tpu.memory_space<vmem>>, vector<6x2x16xf32>
    %c2 = arith.constant 2 : index
    %c0_4 = arith.constant 0 : index
    %c0_5 = arith.constant 0 : index
    %2 = vector.load %arg1[%c2, %c0_4, %c0_5] : memref<8x2x16xf32, #tpu.memory_space<vmem>>, vector<6x2x16xf32>
    %3 = tpu.concatenate %0, %1, %2 in 2 : vector<6x2x16xf32>, vector<6x2x16xf32>, vector<6x2x16xf32> -> vector<6x2x48xf32>
    %4 = vector.shape_cast %3 : vector<6x2x48xf32> to vector<12x48xf32>
    %c0_6 = arith.constant 0 : index
    %c0_7 = arith.constant 0 : index
    %5 = vector.load %arg2[%c0_6, %c0_7] : memref<48x128xf32, #tpu.memory_space<vmem>>, vector<48x128xf32>
    %cst = arith.constant dense<0.000000e+00> : vector<12x128xf32>
    %6 = tpu.matmul %4, %5, %cst {dimension_numbers = #tpu.dot_dimension_numbers<[1], [0], [0], [1], [0, 0, 1, 1], [], []>} : vector<12x48xf32>, vector<48x128xf32>, vector<12x128xf32> -> vector<12x128xf32>
    %7 = vector.shape_cast %6 : vector<12x128xf32> to vector<6x2x128xf32>
    %cst_8 = arith.constant dense<0xFF800000> : vector<2x128xf32>
    %8 = vector.multi_reduction <maximumf>, %7, %cst_8 [0] : vector<6x2x128xf32> to vector<2x128xf32>
    %c0_9 = arith.constant 0 : index
    %c0_10 = arith.constant 0 : index
    %9 = vector.load %arg3[%c0_9, %c0_10] : memref<1x128xf32, #tpu.memory_space<vmem>>, vector<1x128xf32>
    %10 = vector.broadcast %9 : vector<1x128xf32> to vector<2x128xf32>
    %11 = arith.addf %8, %10 : vector<2x128xf32>
    %cst_11 = arith.constant 0.000000e+00 : f32
    %12 = vector.broadcast %cst_11 : f32 to vector<2x128xf32>
    %13 = arith.maximumf %11, %12 : vector<2x128xf32>
    %c0_12 = arith.constant 0 : index
    %c0_13 = arith.constant 0 : index
    %14 = vector.load %arg4[%c0_12, %c0_13] : memref<128x128xf32, #tpu.memory_space<vmem>>, vector<128x128xf32>
    %cst_14 = arith.constant dense<0.000000e+00> : vector<2x128xf32>
    %15 = tpu.matmul %13, %14, %cst_14 {dimension_numbers = #tpu.dot_dimension_numbers<[1], [0], [0], [1], [0, 0, 1, 1], [], []>} : vector<2x128xf32>, vector<128x128xf32>, vector<2x128xf32> -> vector<2x128xf32>
    %c0_15 = arith.constant 0 : index
    %c0_16 = arith.constant 0 : index
    %16 = vector.load %arg5[%c0_15, %c0_16] : memref<1x128xf32, #tpu.memory_space<vmem>>, vector<1x128xf32>
    %17 = vector.broadcast %16 : vector<1x128xf32> to vector<2x128xf32>
    %18 = arith.addf %15, %17 : vector<2x128xf32>
    %cst_17 = arith.constant 0.000000e+00 : f32
    %19 = vector.broadcast %cst_17 : f32 to vector<2x128xf32>
    %20 = arith.maximumf %18, %19 : vector<2x128xf32>
    %c0_18 = arith.constant 0 : index
    %c0_19 = arith.constant 0 : index
    %21 = vector.load %arg6[%c0_18, %c0_19] : memref<2x128xf32, #tpu.memory_space<vmem>>, vector<2x128xf32>
    tpu.vector_store %arg6[%c0_18, %c0_19], %20 {strides = array<i32>} : memref<2x128xf32, #tpu.memory_space<vmem>>, vector<2x128xf32>,
    return
  }
  func.func @transform_0(%arg0: i32) -> (i32, i32, i32) {
    %c0_i32 = arith.constant 0 : i32
    %c0_i32_0 = arith.constant 0 : i32
    %c0_i32_1 = arith.constant 0 : i32
    return %c0_i32, %arg0, %c0_i32_0 : i32, i32, i32
  }
  func.func @transform_1(%arg0: i32) -> (i32, i32) {
    %c0_i32 = arith.constant 0 : i32
    %c0_i32_0 = arith.constant 0 : i32
    %c0_i32_1 = arith.constant 0 : i32
    return %c0_i32, %c0_i32_0 : i32, i32
  }
  func.func @transform_2(%arg0: i32) -> (i32, i32) {
    %c0_i32 = arith.constant 0 : i32
    %c0_i32_0 = arith.constant 0 : i32
    %c0_i32_1 = arith.constant 0 : i32
    return %c0_i32, %c0_i32_0 : i32, i32
  }
  func.func @transform_3(%arg0: i32) -> (i32, i32) {
    %c0_i32 = arith.constant 0 : i32
    %c0_i32_0 = arith.constant 0 : i32
    %c0_i32_1 = arith.constant 0 : i32
    return %c0_i32, %c0_i32_0 : i32, i32
  }
  func.func @transform_4(%arg0: i32) -> (i32, i32) {
    %c0_i32 = arith.constant 0 : i32
    %c0_i32_0 = arith.constant 0 : i32
    %c0_i32_1 = arith.constant 0 : i32
    return %c0_i32, %c0_i32_0 : i32, i32
  }
  func.func @transform_5(%arg0: i32) -> (i32, i32) {
    %c0_i32 = arith.constant 0 : i32
    %c0_i32_0 = arith.constant 0 : i32
    return %arg0, %c0_i32 : i32, i32
  }
}

</mosaic_0001>

<llo_original>
// kernel: tpu_custom_call.1
$region0: #{tpu_custom_call.1}
  #allocation0 [shape = 'u32[]', space=smem, size = 0x4, offset = 0x4, fixed_abs, tag = 'smem constant byte address 0x4 - core index']
  #allocation1 [shape = 'u32[144,128]{1,0:T(1,128)}', space=vmem, size = 0x12000, scoped, tag = 'internal scratch']
  %s0 = inlined_call_operand.hbm [shape: f32[8,2,16], index: 0, kind: input, shape index: {}]
  %s1 = inlined_call_operand.hbm [shape: f32[48,128], index: 1, kind: input, shape index: {}]
  %s2 = inlined_call_operand.vmem [shape: f32[1,128], index: 2, kind: input, shape index: {}]
  %s3 = inlined_call_operand.hbm [shape: f32[128,128], index: 3, kind: input, shape index: {}]
  %s4 = inlined_call_operand.vmem [shape: f32[1,128], index: 4, kind: input, shape index: {}]
  %s5 = inlined_call_operand.hbm [shape: f32[2,128], index: 5, kind: output, shape index: {}]
  %s6 = sld [smem:[#allocation0]]
  $region42: #{tpu_custom_call.1} parent=0
    _
  %s8 = ssub.s32 1, %s6
  %s9 = scalar_select 0, %s8, %s6
  $region1: #{tpu_custom_call.1} parent=0
    #allocation2 [shape = 'u8[8192]{0}', space=vmem, size = 0x2000, scoped, tag = 'input window, operand 0, single buffered']
    #allocation3 [shape = 's32[1]{0}', space=sflag, size = 0x4, scoped, tag = 'scoped memory for tpu_custom_call.1']
    #allocation4 [shape = 's32[1]{0}', space=sflag, size = 0x4, scoped, tag = 'scoped memory for tpu_custom_call.1']
    #allocation5 [shape = 'u8[24576]{0}', space=vmem, size = 0x6000, scoped, tag = 'input window, operand 1, single buffered']
    #allocation6 [shape = 's32[1]{0}', space=sflag, size = 0x4, scoped, tag = 'scoped memory for tpu_custom_call.1']
    #allocation7 [shape = 'u8[65536]{0}', space=vmem, size = 0x10000, scoped, tag = 'input window, operand 3, single buffered']
    #allocation8 [shape = 'u8[1024]{0}', space=vmem, size = 0x400, scoped, tag = 'output window, operand 0, single buffered']
    %10 = vsyncpa [#allocation3], 0
    %11 = vsyncpa [#allocation6], 0
    %12 = vsyncpa [#allocation4], 0
    // Predicated region
    $region2: #{tpu_custom_call.1} parent=1 // pred_check
      _
    $region3: #{tpu_custom_call.1} parent=1 // pred_check_branch
      %14 = sbr.rel (0) target = $region5
    $region4: #{tpu_custom_call.1} parent=1 // pred_region
      %s16 = ssub.s32 256, 256
      %17 = vsyncadd [#allocation3], %s16
      %s18 = sshll.u32 [#allocation2], 4
      %s19 = int_to_ptr.vmem [resolvable:$true] %s18
      %24 = dma.hbm_to_vmem [thread:$0]  %s0, 256, %s19, [#allocation3], 32, 32, 2
    $region5: #{tpu_custom_call.1} parent=1 // pred_fallthru
      _
    // Predicated region
    $region6: #{tpu_custom_call.1} parent=1 // pred_check
      _
    $region7: #{tpu_custom_call.1} parent=1 // pred_check_branch
      %26 = sbr.rel (0) target = $region9
    $region8: #{tpu_custom_call.1} parent=1 // pred_region
      %s28 = ssub.s32 768, 768
      %29 = vsyncadd [#allocation6], %s28
      %s30 = sshll.u32 [#allocation5], 4
      %s31 = int_to_ptr.vmem [resolvable:$true] %s30
      %36 = dma.hbm_to_vmem [thread:$0]  %s1, 768, %s31, [#allocation6], 128, 128, 8
    $region9: #{tpu_custom_call.1} parent=1 // pred_fallthru
      _
    // Predicated region
    $region10: #{tpu_custom_call.1} parent=1 // pred_check
      _
    $region11: #{tpu_custom_call.1} parent=1 // pred_check_branch
      %38 = sbr.rel (0) target = $region13
    $region12: #{tpu_custom_call.1} parent=1 // pred_region
      _
    $region13: #{tpu_custom_call.1} parent=1 // pred_fallthru
      _
    // Predicated region
    $region14: #{tpu_custom_call.1} parent=1 // pred_check
      _
    $region15: #{tpu_custom_call.1} parent=1 // pred_check_branch
      %40 = sbr.rel (0) target = $region17
    $region16: #{tpu_custom_call.1} parent=1 // pred_region
      %s42 = ssub.s32 2048, 2048
      %43 = vsyncadd [#allocation6], %s42
      %s44 = sshll.u32 [#allocation7], 4
      %s45 = int_to_ptr.vmem [resolvable:$true] %s44
      %50 = dma.hbm_to_vmem [thread:$0]  %s3, 2048, %s45, [#allocation6], 128, 128, 8
    $region17: #{tpu_custom_call.1} parent=1 // pred_fallthru
      _
    // Predicated region
    $region18: #{tpu_custom_call.1} parent=1 // pred_check
      _
    $region19: #{tpu_custom_call.1} parent=1 // pred_check_branch
      %52 = sbr.rel (0) target = $region21
    $region20: #{tpu_custom_call.1} parent=1 // pred_region
      _
    $region21: #{tpu_custom_call.1} parent=1 // pred_fallthru
      _
    // Predicated region
    $region22: #{tpu_custom_call.1} parent=1 // pred_check
      _
    $region23: #{tpu_custom_call.1} parent=1 // pred_check_branch
      %54 = sbr.rel (0) target = $region25
    $region24: #{tpu_custom_call.1} parent=1 // pred_region
      %55 = dma.done [#allocation3], 256
    $region25: #{tpu_custom_call.1} parent=1 // pred_fallthru
      _
    // Predicated region
    $region26: #{tpu_custom_call.1} parent=1 // pred_check
      _
    $region27: #{tpu_custom_call.1} parent=1 // pred_check_branch
      %57 = sbr.rel (0) target = $region29
    $region28: #{tpu_custom_call.1} parent=1 // pred_region
      %58 = dma.done [#allocation6], 768
    $region29: #{tpu_custom_call.1} parent=1 // pred_fallthru
      _
    // Predicated region
    $region30: #{tpu_custom_call.1} parent=1 // pred_check
      _
    $region31: #{tpu_custom_call.1} parent=1 // pred_check_branch
      %60 = sbr.rel (0) target = $region33
    $region32: #{tpu_custom_call.1} parent=1 // pred_region
      %61 = dma.done [#allocation6], 2048
    $region33: #{tpu_custom_call.1} parent=1 // pred_fallthru
      _
    %v62 = vld [vmem:[#allocation2] sm:$0x3]
    %v63 = vld [vmem:[#allocation2 + $0x2] sm:$0x3]
    %v64 = vld [vmem:[#allocation2 + $0x4] sm:$0x3]
    %v65 = vld [vmem:[#allocation2 + $0x6] sm:$0x3]
    %v66 = vld [vmem:[#allocation2 + $0x8] sm:$0x3]
    %v67 = vld [vmem:[#allocation2 + $0xa] sm:$0x3]
    %s68 = scalar_lea.vmem [#allocation2], 2
    %v69 = vld [vmem:[%s68] sm:$0x3]
    %v70 = vld [vmem:[%s68 + $0x2] sm:$0x3]
    %v71 = vld [vmem:[%s68 + $0x4] sm:$0x3]
    %v72 = vld [vmem:[%s68 + $0x6] sm:$0x3]
    %v73 = vld [vmem:[%s68 + $0x8] sm:$0x3]
    %v74 = vld [vmem:[%s68 + $0xa] sm:$0x3]
    %s75 = scalar_lea.vmem [#allocation2], 4
    %v76 = vld [vmem:[%s75] sm:$0x3]
    %v77 = vld [vmem:[%s75 + $0x2] sm:$0x3]
    %v78 = vld [vmem:[%s75 + $0x4] sm:$0x3]
    %v79 = vld [vmem:[%s75 + $0x6] sm:$0x3]
    %v80 = vld [vmem:[%s75 + $0x8] sm:$0x3]
    %v81 = vld [vmem:[%s75 + $0xa] sm:$0x3]
    %88 = vrot.lane.b32.xlu0 %v69, 16
    %v89 = vpop.permute.xlu0 %88
    %90 = vrot.lane.b32.xlu0 %v70, 16
    %v91 = vpop.permute.xlu0 %90
    %92 = vrot.lane.b32.xlu0 %v71, 16
    %v93 = vpop.permute.xlu0 %92
    %94 = vrot.lane.b32.xlu0 %v72, 16
    %v95 = vpop.permute.xlu0 %94
    %96 = vrot.lane.b32.xlu0 %v73, 16
    %v97 = vpop.permute.xlu0 %96
    %98 = vrot.lane.b32.xlu0 %v74, 16
    %v99 = vpop.permute.xlu0 %98
    %112 = vrot.lane.b32.xlu0 %v76, 32
    %v113 = vpop.permute.xlu0 %112
    %114 = vrot.lane.b32.xlu0 %v77, 32
    %v115 = vpop.permute.xlu0 %114
    %116 = vrot.lane.b32.xlu0 %v78, 32
    %v117 = vpop.permute.xlu0 %116
    %118 = vrot.lane.b32.xlu0 %v79, 32
    %v119 = vpop.permute.xlu0 %118
    %120 = vrot.lane.b32.xlu0 %v80, 32
    %v121 = vpop.permute.xlu0 %120
    %122 = vrot.lane.b32.xlu0 %v81, 32
    %v123 = vpop.permute.xlu0 %122
    %vm130 = vcmask 130048
    %v131 = vsel %vm130, %v62, %v89
    %v132 = vsel %vm130, %v63, %v91
    %v133 = vsel %vm130, %v64, %v93
    %v134 = vsel %vm130, %v65, %v95
    %v135 = vsel %vm130, %v66, %v97
    %v136 = vsel %vm130, %v67, %v99
    %vm137 = vcmask 261120
    %v138 = vsel %vm137, %v131, %v113
    %v139 = vsel %vm137, %v132, %v115
    %v140 = vsel %vm137, %v133, %v117
    %v141 = vsel %vm137, %v134, %v119
    %v142 = vsel %vm137, %v135, %v121
    %v143 = vsel %vm137, %v136, %v123
    %v144 = vld [vmem:[#allocation5] sm:$0xff]
    %v145 = vld [vmem:[#allocation5 + $0x8] sm:$0xff]
    %v146 = vld [vmem:[#allocation5 + $0x10] sm:$0xff]
    %v147 = vld [vmem:[#allocation5 + $0x18] sm:$0xff]
    %v148 = vld [vmem:[#allocation5 + $0x20] sm:$0xff]
    %v149 = vld [vmem:[#allocation5 + $0x28] sm:$0xff]
    %v156 = vcombine.low %v138, %v139
    %v157 = vcombine.low %v140, %v141
    %v159 = vunpack.c.l.s4 1983009808
    %v160 = vunpack.c.0.s8 %v159
    %v161 = vlaneseq
    %v162 = vshrl.u32 %v161, 7
    %v163 = vsub.s32 %v160, %v162
    %v164 = vrot.slane %v156, %v163
    %v166 = vunpack.c.l.s4 1983009808
    %v167 = vunpack.c.0.s8 %v166
    %v168 = vlaneseq
    %v169 = vshrl.u32 %v168, 7
    %v170 = vsub.s32 %v167, %v169
    %v171 = vrot.slane %v157, %v170
    %v172 = vcombine.low %v164, %v171
    %v173 = vcombine.low %v142, %v143
    %v175 = vunpack.c.l.s4 1983009808
    %v176 = vunpack.c.0.s8 %v175
    %v177 = vlaneseq
    %v178 = vshrl.u32 %v177, 7
    %v179 = vsub.s32 %v176, %v178
    %v180 = vrot.slane %v173, %v179
    %vm181 = vcmask 392192
    %v182 = vsel %vm181, %v172, 0
    %v184 = vsel %vm181, %v180, 0
    %186 = vmatprep.subr.mxu0 0.0
    %187 = vmatpush1.msra.mxu0 0.0
    %188 = vmatprep.subr.mxu0 0.0
    %189 = vmatpush1.msra.mxu0 0.0
    %190 = vmatprep.subr.mxu0 0.0
    %191 = vmatpush1.msra.mxu0 0.0
    %192 = vmatprep.subr.mxu0 0.0
    %193 = vmatpush1.msra.mxu0 0.0
    %194 = vmatprep.subr.mxu0 0.0
    %195 = vmatpush1.msra.mxu0 0.0
    %196 = vmatprep.subr.mxu0 0.0
    %197 = vmatpush1.msra.mxu0 0.0
    %198 = vmatprep.subr.mxu0 0.0
    %199 = vmatpush1.msra.mxu0 0.0
    %200 = vmatprep.subr.mxu0 0.0
    %201 = vmatpush1.msra.mxu0 0.0
    %202 = vmatprep.subr.mxu0 0.0
    %203 = vmatpush1.msra.mxu0 0.0
    %204 = vmatprep.subr.mxu0 0.0
    %205 = vmatpush1.msra.mxu0 0.0
    %206 = vmatprep.subr.mxu0 0.0
    %207 = vmatpush1.msra.mxu0 %v149
    %208 = vmatprep.subr.mxu0 0.0
    %209 = vmatpush1.msra.mxu0 %v148
    %210 = vmatprep.subr.mxu0 0.0
    %211 = vmatpush1.msra.mxu0 %v147
    %212 = vmatprep.subr.mxu0 0.0
    %213 = vmatpush1.msra.mxu0 %v146
    %214 = vmatprep.subr.mxu0 0.0
    %215 = vmatpush1.msra.mxu0 %v145
    %216 = vmatprep.subr.mxu0 0.0
    %217 = vmatpush1.msra.mxu0 %v144
    %218 = vmatprep.subr.mxu0 0.0
    %219 = vmatpush2.msra.mxu0 0.0
    %220 = vmatprep.subr.mxu0 0.0
    %221 = vmatpush2.msra.mxu0 0.0
    %222 = vmatprep.subr.mxu0 0.0
    %223 = vmatpush2.msra.mxu0 0.0
    %224 = vmatprep.subr.mxu0 0.0
    %225 = vmatpush2.msra.mxu0 0.0
    %226 = vmatprep.subr.mxu0 0.0
    %227 = vmatpush2.msra.mxu0 0.0
    %228 = vmatprep.subr.mxu0 0.0
    %229 = vmatpush2.msra.mxu0 0.0
    %230 = vmatprep.subr.mxu0 0.0
    %231 = vmatpush2.msra.mxu0 0.0
    %232 = vmatprep.subr.mxu0 0.0
    %233 = vmatpush2.msra.mxu0 0.0
    %234 = vmatprep.subr.mxu0 0.0
    %235 = vmatpush2.msra.mxu0 0.0
    %236 = vmatprep.subr.mxu0 0.0
    %237 = vmatpush2.msra.mxu0 0.0
    %238 = vmatprep.subr.mxu0 0.0
    %239 = vmatpush2.msra.mxu0 0.0
    %240 = vmatprep.subr.mxu0 0.0
    %241 = vmatpush2.msra.mxu0 0.0
    %242 = vmatprep.subr.mxu0 0.0
    %243 = vmatpush2.msra.mxu0 0.0
    %244 = vmatprep.subr.mxu0 0.0
    %245 = vmatpush2.msra.mxu0 0.0
    %246 = vmatprep.subr.mxu0 0.0
    %247 = vmatpush2.msra.mxu0 0.0
    %248 = vmatprep.subr.mxu0 0.0
    %249 = vmatpush2.msra.mxu0 0.0
    %250 = vmatprep.mubr.f32.mxu0 0.0
    %251 = vmatmul.mubr.f32.gmra.mxu0 %v182
    %v252 = vpop.f32.mrf.mxu0
    %v253 = vadd.f32 0.0, %v252
    %v254 = vpop.f32.mrf.mxu0
    %255 = vmatprep.mubr.f32.mxu0 0.0
    %256 = vmatmul.mubr.f32.gmra.mxu0 %v184
    %v257 = vpop.f32.mrf.mxu0
    %v258 = vadd.f32 0.0, %v257
    %v259 = vpop.f32.mrf.mxu0
    %260 = vdwg.mxu0
    %v263 = vcombine.high %v253, %v253
    %v265 = vunpack.c.l.s4 1983009808
    %v266 = vunpack.c.0.s8 %v265
    %v267 = vlaneseq
    %v268 = vshrl.u32 %v267, 7
    %v269 = vsub.s32 %v266, %v268
    %v270 = vrot.slane %v253, %v269
    %v272 = vunpack.c.l.s4 1983009808
    %v273 = vunpack.c.0.s8 %v272
    %v274 = vlaneseq
    %v275 = vshrl.u32 %v274, 7
    %v276 = vsub.s32 %v273, %v275
    %v277 = vrot.slane %v263, %v276
    %v278 = vcombine.high %v270, %v270
    %v279 = vcombine.high %v277, %v277
    %v281 = vunpack.c.l.s4 1983009808
    %v282 = vunpack.c.0.s8 %v281
    %v283 = vlaneseq
    %v284 = vshrl.u32 %v283, 7
    %v285 = vsub.s32 %v282, %v284
    %v286 = vrot.slane %v258, %v285
    %v287 = vcombine.high %v286, %v286
    %vm294 = vcmask 1041408
    %v295 = vsel %vm294, %v270, -inf
    %v296 = vsel %vm294, %v278, -inf
    %v297 = vsel %vm294, %v277, -inf
    %v298 = vsel %vm294, %v279, -inf
    %v299 = vsel %vm294, %v286, -inf
    %v300 = vmax.f32 %v295, %v299
    %v301 = vsel %vm294, %v287, -inf
    %v302 = vmax.f32 %v296, %v301
    %v303 = vmax.f32 %v300, %v302
    %v304 = vmax.f32 %v297, %v298
    %v305 = vmax.f32 %v303, %v304
    %v306 = vld [vmem:[%s2] sm:$0x1]
    %v308 = vlaneseq
    %v309 = vshrl.u32 %v308, 7
    %v310 = vsub.s32 0, %v309
    %v311 = vrot.slane %v306, %v310
    %v313 = vadd.f32 %v305, %v311
    %v314 = vmax.f32 %v313, 0.0
    %v315 = vld [vmem:[#allocation7] sm:$0xff]
    %v316 = vld [vmem:[#allocation7 + $0x8] sm:$0xff]
    %v317 = vld [vmem:[#allocation7 + $0x10] sm:$0xff]
    %v318 = vld [vmem:[#allocation7 + $0x18] sm:$0xff]
    %v319 = vld [vmem:[#allocation7 + $0x20] sm:$0xff]
    %v320 = vld [vmem:[#allocation7 + $0x28] sm:$0xff]
    %v321 = vld [vmem:[#allocation7 + $0x30] sm:$0xff]
    %v322 = vld [vmem:[#allocation7 + $0x38] sm:$0xff]
    %v323 = vld [vmem:[#allocation7 + $0x40] sm:$0xff]
    %v324 = vld [vmem:[#allocation7 + $0x48] sm:$0xff]
    %v325 = vld [vmem:[#allocation7 + $0x50] sm:$0xff]
    %v326 = vld [vmem:[#allocation7 + $0x58] sm:$0xff]
    %v327 = vld [vmem:[#allocation7 + $0x60] sm:$0xff]
    %v328 = vld [vmem:[#allocation7 + $0x68] sm:$0xff]
    %v329 = vld [vmem:[#allocation7 + $0x70] sm:$0xff]
    %v330 = vld [vmem:[#allocation7 + $0x78] sm:$0xff]
    %v331 = vld [vmem:[%s4] sm:$0x1]
    %v333 = vlaneseq
    %v334 = vshrl.u32 %v333, 7
    %v335 = vsub.s32 0, %v334
    %v336 = vrot.slane %v331, %v335
    %338 = vmatprep.subr.mxu0 0.0
    %339 = vmatpush1.msra.mxu0 %v330
    %340 = vmatprep.subr.mxu0 0.0
    %341 = vmatpush1.msra.mxu0 %v329
    %342 = vmatprep.subr.mxu0 0.0
    %343 = vmatpush1.msra.mxu0 %v328
    %344 = vmatprep.subr.mxu0 0.0
    %345 = vmatpush1.msra.mxu0 %v327
    %346 = vmatprep.subr.mxu0 0.0
    %347 = vmatpush1.msra.mxu0 %v326
    %348 = vmatprep.subr.mxu0 0.0
    %349 = vmatpush1.msra.mxu0 %v325
    %350 = vmatprep.subr.mxu0 0.0
    %351 = vmatpush1.msra.mxu0 %v324
    %352 = vmatprep.subr.mxu0 0.0
    %353 = vmatpush1.msra.mxu0 %v323
    %354 = vmatprep.subr.mxu0 0.0
    %355 = vmatpush1.msra.mxu0 %v322
    %356 = vmatprep.subr.mxu0 0.0
    %357 = vmatpush1.msra.mxu0 %v321
    %358 = vmatprep.subr.mxu0 0.0
    %359 = vmatpush1.msra.mxu0 %v320
    %360 = vmatprep.subr.mxu0 0.0
    %361 = vmatpush1.msra.mxu0 %v319
    %362 = vmatprep.subr.mxu0 0.0
    %363 = vmatpush1.msra.mxu0 %v318
    %364 = vmatprep.subr.mxu0 0.0
    %365 = vmatpush1.msra.mxu0 %v317
    %366 = vmatprep.subr.mxu0 0.0
    %367 = vmatpush1.msra.mxu0 %v316
    %368 = vmatprep.subr.mxu0 0.0
    %369 = vmatpush1.msra.mxu0 %v315
    %370 = vmatprep.subr.mxu0 0.0
    %371 = vmatpush2.msra.mxu0 0.0
    %372 = vmatprep.subr.mxu0 0.0
    %373 = vmatpush2.msra.mxu0 0.0
    %374 = vmatprep.subr.mxu0 0.0
    %375 = vmatpush2.msra.mxu0 0.0
    %376 = vmatprep.subr.mxu0 0.0
    %377 = vmatpush2.msra.mxu0 0.0
    %378 = vmatprep.subr.mxu0 0.0
    %379 = vmatpush2.msra.mxu0 0.0
    %380 = vmatprep.subr.mxu0 0.0
    %381 = vmatpush2.msra.mxu0 0.0
    %382 = vmatprep.subr.mxu0 0.0
    %383 = vmatpush2.msra.mxu0 0.0
    %384 = vmatprep.subr.mxu0 0.0
    %385 = vmatpush2.msra.mxu0 0.0
    %386 = vmatprep.subr.mxu0 0.0
    %387 = vmatpush2.msra.mxu0 0.0
    %388 = vmatprep.subr.mxu0 0.0
    %389 = vmatpush2.msra.mxu0 0.0
    %390 = vmatprep.subr.mxu0 0.0
    %391 = vmatpush2.msra.mxu0 0.0
    %392 = vmatprep.subr.mxu0 0.0
    %393 = vmatpush2.msra.mxu0 0.0
    %394 = vmatprep.subr.mxu0 0.0
    %395 = vmatpush2.msra.mxu0 0.0
    %396 = vmatprep.subr.mxu0 0.0
    %397 = vmatpush2.msra.mxu0 0.0
    %398 = vmatprep.subr.mxu0 0.0
    %399 = vmatpush2.msra.mxu0 0.0
    %400 = vmatprep.subr.mxu0 0.0
    %401 = vmatpush2.msra.mxu0 0.0
    %402 = vmatprep.mubr.f32.mxu0 0.0
    %403 = vmatmul.mubr.f32.gmra.mxu0 %v314
    %v404 = vpop.f32.mrf.mxu0
    %v405 = vadd.f32 %v336, %v404
    %v406 = vpop.f32.mrf.mxu0
    %407 = vdwg.mxu0
    %v408 = vmax.f32 %v405, 0.0
    %409 = vst [vmem:[#allocation8] sm:$0x3] %v408
    // Predicated region
    $region34: #{tpu_custom_call.1} parent=1 // pred_check
      _
    $region35: #{tpu_custom_call.1} parent=1 // pred_check_branch
      %411 = sbr.rel (0) target = $region37
    $region36: #{tpu_custom_call.1} parent=1 // pred_region
      %s413 = ssub.s32 32, 32
      %414 = vsyncadd [#allocation4], %s413
      %s416 = sshll.u32 [#allocation8], 4
      %s417 = int_to_ptr.vmem [resolvable:$true] %s416
      %419 = dma.vmem_to_hbm [thread:$0]  %s417, 32, %s5, [#allocation4]
    $region37: #{tpu_custom_call.1} parent=1 // pred_fallthru
      _
    // Predicated region
    $region38: #{tpu_custom_call.1} parent=1 // pred_check
      _
    $region39: #{tpu_custom_call.1} parent=1 // pred_check_branch
      %421 = sbr.rel (0) target = $region41
    $region40: #{tpu_custom_call.1} parent=1 // pred_region
      %422 = dma.done [#allocation4], 32
    $region41: #{tpu_custom_call.1} parent=1 // pred_fallthru
      _
    %423 = vsyncpa [#allocation3], 1
    %424 = vsyncpa [#allocation6], 1
    %425 = vsyncpa [#allocation4], 1

</llo_original>
